<compile_context>
chip_gen: v5e
topology: v5e:2x2
jax: 0.10.0
libtpu: 0.0.40
codegen_flags: <defaults>
</compile_context>

<pallas_src>
import functools

import jax
import jax.numpy as jnp
from jax import lax
from jax.experimental import pallas as pl
from jax.experimental.pallas import tpu as pltpu


_LANES = 128
_MAX_TM = 1024                      # rows per tile (review: 1024-2048)
_VMEM_LIMIT = 32 * 1024 * 1024      # explicit scoped-VMEM limit (fits v5e..v7x)


# ----------------------------- small helpers -----------------------------

def _round_up(x, m):
    return (x + m - 1) // m * m


def _layout(n, itemsizes):
    """Static tiling decisions for a flattened [rows, 128] layout."""
    rows = -(-n // _LANES)                       # rows of the 2-D view
    sub = 16 if min(itemsizes) < 4 else 8        # sublane align (16 for bf16/f16)
    tm = min(_MAX_TM, _round_up(rows, sub))      # rows per block
    total_blocks = -(-rows // tm)
    n_split = 2 if total_blocks >= 2 else 1      # v7x: one partial per core
    bpc = -(-total_blocks // n_split)            # blocks per split
    return rows, tm, total_blocks, n_split, bpc


# --------------------------- Pallas kernel bodies -------------------------

def _smooth_l1_sum_kernel(y1_ref, y2_ref, y1p_ref, y2p_ref, o_ref, acc_ref, *,
                          tm, bpc, n_elems, needs_mask):
    """Per-split sum of smooth_l1(Y1_-Y1) + smooth_l1(Y2_-Y2).

    Elementwise accumulation into a (tm, 128) f32 VMEM scratch; the single
    cross-lane reduction + store happens only on the last inner grid step.
    """
    i = pl.program_id(1)

    @pl.when(i == 0)
    def _init():
        acc_ref[...] = jnp.zeros_like(acc_ref)

    d1 = y1p_ref[...].astype(jnp.float32) - y1_ref[...].astype(jnp.float32)
    d2 = y2p_ref[...].astype(jnp.float32) - y2_ref[...].astype(jnp.float32)
    ad1 = jnp.abs(d1)
    ad2 = jnp.abs(d2)
    contrib = (jnp.where(ad1 < 1.0, 0.5 * d1 * d1, ad1 - 0.5)
               + jnp.where(ad2 < 1.0, 0.5 * d2 * d2, ad2 - 0.5))

    if needs_mask:  # static (trace-time) decision; only emitted when ragged
        blk = pl.program_id(0) * bpc + i                  # logical block index
        row0 = blk * tm
        rows = row0 + lax.broadcasted_iota(jnp.int32, (tm, _LANES), 0)
        lanes = lax.broadcasted_iota(jnp.int32, (tm, _LANES), 1)
        valid = rows * _LANES + lanes < n_elems
        contrib = jnp.where(valid, contrib, 0.0)

    acc_ref[...] += contrib

    @pl.when(i == pl.num_programs(1) - 1)
    def _finalize():
        o_ref[...] = jnp.broadcast_to(jnp.sum(acc_ref[...]), (8, _LANES))


def _hinge_kernel(s_ref, y1p_ref, y2p_ref, o_ref):
    """out = loss1 + lamda * max(Y2_ - Y1_ + delta, 0); scalars from SMEM."""
    loss1 = s_ref[0]
    lam = s_ref[1]
    delta = s_ref[2]
    diff = y2p_ref[...].astype(jnp.float32) - y1p_ref[...].astype(jnp.float32)
    hinge = jnp.maximum(diff + delta, 0.0)
    o_ref[...] = (loss1 + lam * hinge).astype(o_ref.dtype)


# ------------------------------ forward pass ------------------------------

def joint_loss2(Y1, Y2, Y1_, Y2_, lamda, delta):
    """Matches Joint_loss2.forward for scalar `lamda` / `delta`."""
    assert Y1.shape == Y2.shape == Y1_.shape == Y2_.shape, "expect equal shapes"
    out_shape = Y2_.shape
    out_dtype = Y2_.dtype
    n = 1
    for s in out_shape:
        n *= s

    itemsizes = [jnp.dtype(a.dtype).itemsize for a in (Y1, Y2, Y1_, Y2_)]
    rows, tm, total_blocks, n_split, bpc = _layout(n, itemsizes)
    lane_aligned = (rows * _LANES == n)

    def to_tiles(x):
        flat = jnp.reshape(x, (-1,))          # bitcast reshape, no HBM copy
        if not lane_aligned:
            # TODO(synk): rare ragged-lane fallback (n % 128 != 0) still pads;
            # could be removed with a dedicated tail kernel if it matters.
            flat = jnp.pad(flat, (0, rows * _LANES - n))
        return flat.reshape(rows, _LANES)

    y1t, y2t, y1pt, y2pt = (to_tiles(a) for a in (Y1, Y2, Y1_, Y2_))

    # Mask needed only if the grid coverage exceeds the valid element count
    # (block/row overrun at the boundary, or the padded-lane fallback).
    needs_mask = (n_split * bpc * tm * _LANES) != n

    # ---- Pass 1: fused smooth-L1 reduction over both pairs (single read). ----
    # Clamp keeps the DMA in-bounds when the split overruns the block count;
    # the in-kernel mask (based on the *unclamped* index) zeroes the duplicate.
    red_spec = pl.BlockSpec(
        (tm, _LANES),
        lambda c, i: (jnp.minimum(c * bpc + i, total_blocks - 1), 0))

    kern1 = functools.partial(_smooth_l1_sum_kernel, tm=tm, bpc=bpc,
                              n_elems=n, needs_mask=needs_mask)

    partials = pl.pallas_call(
        kern1,
        out_shape=jax.ShapeDtypeStruct((n_split * 8, _LANES), jnp.float32),
        grid=(n_split, bpc),
        in_specs=[red_spec, red_spec, red_spec, red_spec],
        out_specs=pl.BlockSpec((8, _LANES), lambda c, i: (c, 0)),
        scratch_shapes=[pltpu.VMEM((tm, _LANES), jnp.float32)],
        compiler_params=pltpu.CompilerParams(
            dimension_semantics=("parallel", "arbitrary"),
            vmem_limit_bytes=_VMEM_LIMIT),
        cost_estimate=pl.CostEstimate(
            flops=16 * n, transcendentals=0,
            bytes_accessed=int(sum(itemsizes)) * n),
    )(y1t, y2t, y1pt, y2pt)

    loss1 = jnp.sum(partials[::8, 0]) / jnp.float32(n)

    scalars = jnp.stack([
        loss1,
        jnp.asarray(lamda, jnp.float32).reshape(()),
        jnp.asarray(delta, jnp.float32).reshape(()),
    ])

    # ---- Pass 2: fused hinge + scale + scalar add, single output write. ----
    ew_spec = pl.BlockSpec((tm, _LANES), lambda i: (i, 0))
    out = pl.pallas_call(
        _hinge_kernel,
        out_shape=jax.ShapeDtypeStruct((rows, _LANES), out_dtype),
        grid=(total_blocks,),
        in_specs=[
            pl.BlockSpec(memory_space=pltpu.MemorySpace.SMEM),   # (3,) scalars
            ew_spec,
            ew_spec,
        ],
        out_specs=ew_spec,
        compiler_params=pltpu.CompilerParams(
            dimension_semantics=("parallel",),
            vmem_limit_bytes=_VMEM_LIMIT),
        cost_estimate=pl.CostEstimate(
            flops=4 * n, transcendentals=0,
            bytes_accessed=(itemsizes[2] + itemsizes[3]
                            + jnp.dtype(out_dtype).itemsize) * n),
    )(scalars, y1pt, y2pt)

    if lane_aligned:
        return out.reshape(out_shape)            # free bitcast reshape
    return out.reshape(-1)[:n].reshape(out_shape)


# ------------------------------ reference ---------------------------------

def _reference(Y1, Y2, Y1_, Y2_, lamda, delta):
    def sl1_mean(a, b):
        d = a.astype(jnp.float32) - b.astype(jnp.float32)
        ad = jnp.abs(d)
        return jnp.mean(jnp.where(ad < 1.0, 0.5 * d * d, ad - 0.5))
    loss1 = sl1_mean(Y1_, Y1) + sl1_mean(Y2_, Y2)
    hinge = jnp.maximum(Y2_.astype(jnp.float32) - Y1_.astype(jnp.float32)
                        + delta, 0.0)
    return loss1 + lamda * hinge


def _check(shape, key, lamda, delta):
    k1, k2, k3, k4 = jax.random.split(key, 4)
    Y1 = jax.random.normal(k1, shape, jnp.float32)
    Y2 = jax.random.normal(k2, shape, jnp.float32)
    Y1_ = jax.random.normal(k3, shape, jnp.float32)
    Y2_ = jax.random.normal(k4, shape, jnp.float32)

    out = jax.jit(joint_loss2)(Y1, Y2, Y1_, Y2_, lamda, delta)
    out = jax.block_until_ready(out)

    expected = _reference(Y1, Y2, Y1_, Y2_, lamda, delta)
    assert out.shape == shape, (out.shape, shape)
    assert bool(jnp.all(jnp.isfinite(out)))
    err = float(jnp.max(jnp.abs(out - expected)))
    assert bool(jnp.allclose(out, expected, atol=1e-4, rtol=1e-5)), (shape, err)


if __name__ == "__main__":
    key = jax.random.PRNGKey(0)
    ka, kb, kc = jax.random.split(key, 3)

    # Primary small case (single block, no masking).
    _check((2, 4, 16, 16), ka, 0.5, 0.1)
    # Exercises the 2-way split, clamped index_map and boundary-block masking.
    _check((2, 9, 128, 128), kb, 0.25, 0.2)
    # Exercises the ragged (n % 128 != 0) fallback path.
    _check((3, 5, 7, 11), kc, 1.5, 0.05)

    print("KERNEL_OK")
</pallas_src>

<mosaic_0001>
module attributes {stable_mosaic.version = 11 : i64} {
  func.func @_smooth_l1_sum_kernel(%arg0: i32, %arg1: i32, %arg2: memref<16x128xf32, #tpu.memory_space<vmem>>, %arg3: memref<16x128xf32, #tpu.memory_space<vmem>>, %arg4: memref<16x128xf32, #tpu.memory_space<vmem>>, %arg5: memref<16x128xf32, #tpu.memory_space<vmem>>, %arg6: memref<8x128xf32, #tpu.memory_space<vmem>>, %arg7: memref<16x128xf32, #tpu.memory_space<vmem>>) attributes {dimension_semantics = [#tpu.dimension_semantics<parallel>, #tpu.dimension_semantics<arbitrary>], iteration_bounds = array<i64: 1, 1>, scalar_prefetch = 0 : i64, scratch_operands = 1 : i64, tpu.core_type = #tpu.core_type<tc>, window_params = [{transform_indices = @transform_0, window_bounds = array<i64: 16, 128>}, {transform_indices = @transform_1, window_bounds = array<i64: 16, 128>}, {transform_indices = @transform_2, window_bounds = array<i64: 16, 128>}, {transform_indices = @transform_3, window_bounds = array<i64: 16, 128>}, {transform_indices = @transform_4, window_bounds = array<i64: 8, 128>}]} {
    %c0_i32 = arith.constant 0 : i32
    %0 = arith.cmpi eq, %arg1, %c0_i32 : i32
    %1 = arith.extui %0 : i1 to i32
    %c0_i32_0 = arith.constant 0 : i32
    %2 = arith.cmpi ne, %1, %c0_i32_0 : i32
    scf.if %2 {
      %cst_19 = arith.constant 0.000000e+00 : f32
      %34 = vector.broadcast %cst_19 : f32 to vector<16x128xf32>
      %c0_20 = arith.constant 0 : index
      %c0_21 = arith.constant 0 : index
      %35 = vector.load %arg7[%c0_20, %c0_21] : memref<16x128xf32, #tpu.memory_space<vmem>>, vector<16x128xf32>
      tpu.vector_store %arg7[%c0_20, %c0_21], %34 {strides = array<i32>} : memref<16x128xf32, #tpu.memory_space<vmem>>, vector<16x128xf32>,
    } else {
    }
    %c0 = arith.constant 0 : index
    %c0_1 = arith.constant 0 : index
    %3 = vector.load %arg4[%c0, %c0_1] : memref<16x128xf32, #tpu.memory_space<vmem>>, vector<16x128xf32>
    %c0_2 = arith.constant 0 : index
    %c0_3 = arith.constant 0 : index
    %4 = vector.load %arg2[%c0_2, %c0_3] : memref<16x128xf32, #tpu.memory_space<vmem>>, vector<16x128xf32>
    %5 = arith.subf %3, %4 : vector<16x128xf32>
    %c0_4 = arith.constant 0 : index
    %c0_5 = arith.constant 0 : index
    %6 = vector.load %arg5[%c0_4, %c0_5] : memref<16x128xf32, #tpu.memory_space<vmem>>, vector<16x128xf32>
    %c0_6 = arith.constant 0 : index
    %c0_7 = arith.constant 0 : index
    %7 = vector.load %arg3[%c0_6, %c0_7] : memref<16x128xf32, #tpu.memory_space<vmem>>, vector<16x128xf32>
    %8 = arith.subf %6, %7 : vector<16x128xf32>
    %9 = math.absf %5 : vector<16x128xf32>
    %10 = math.absf %8 : vector<16x128xf32>
    %cst = arith.constant 1.000000e+00 : f32
    %11 = vector.broadcast %cst : f32 to vector<16x128xf32>
    %12 = arith.cmpf olt, %9, %11 : vector<16x128xf32>
    %cst_8 = arith.constant 5.000000e-01 : f32
    %13 = vector.broadcast %cst_8 : f32 to vector<16x128xf32>
    %14 = arith.mulf %13, %5 : vector<16x128xf32>
    %15 = arith.mulf %14, %5 : vector<16x128xf32>
    %cst_9 = arith.constant 5.000000e-01 : f32
    %16 = vector.broadcast %cst_9 : f32 to vector<16x128xf32>
    %17 = arith.subf %9, %16 : vector<16x128xf32>
    %18 = arith.select %12, %15, %17 : vector<16x128xi1>, vector<16x128xf32>
    %cst_10 = arith.constant 1.000000e+00 : f32
    %19 = vector.broadcast %cst_10 : f32 to vector<16x128xf32>
    %20 = arith.cmpf olt, %10, %19 : vector<16x128xf32>
    %cst_11 = arith.constant 5.000000e-01 : f32
    %21 = vector.broadcast %cst_11 : f32 to vector<16x128xf32>
    %22 = arith.mulf %21, %8 : vector<16x128xf32>
    %23 = arith.mulf %22, %8 : vector<16x128xf32>
    %cst_12 = arith.constant 5.000000e-01 : f32
    %24 = vector.broadcast %cst_12 : f32 to vector<16x128xf32>
    %25 = arith.subf %10, %24 : vector<16x128xf32>
    %26 = arith.select %20, %23, %25 : vector<16x128xi1>, vector<16x128xf32>
    %27 = arith.addf %18, %26 : vector<16x128xf32>
    %c0_13 = arith.constant 0 : index
    %c0_14 = arith.constant 0 : index
    %28 = vector.load %arg7[%c0_13, %c0_14] : memref<16x128xf32, #tpu.memory_space<vmem>>, vector<16x128xf32>
    %29 = arith.addf %28, %27 : vector<16x128xf32>
    %c0_15 = arith.constant 0 : index
    %c0_16 = arith.constant 0 : index
    %30 = vector.load %arg7[%c0_15, %c0_16] : memref<16x128xf32, #tpu.memory_space<vmem>>, vector<16x128xf32>
    tpu.vector_store %arg7[%c0_15, %c0_16], %29 {strides = array<i32>} : memref<16x128xf32, #tpu.memory_space<vmem>>, vector<16x128xf32>,
    %c0_i32_17 = arith.constant 0 : i32
    %31 = arith.cmpi eq, %arg1, %c0_i32_17 : i32
    %32 = arith.extui %31 : i1 to i32
    %c0_i32_18 = arith.constant 0 : i32
    %33 = arith.cmpi ne, %32, %c0_i32_18 : i32
    scf.if %33 {
      %c0_19 = arith.constant 0 : index
      %c0_20 = arith.constant 0 : index
      %34 = vector.load %arg7[%c0_19, %c0_20] : memref<16x128xf32, #tpu.memory_space<vmem>>, vector<16x128xf32>
      %35 = vector.shape_cast %34 : vector<16x128xf32> to vector<1x16x128xf32>
      %cst_21 = arith.constant dense<0.000000e+00> : vector<1xf32>
      %36 = vector.multi_reduction <add>, %35, %cst_21 [1, 2] : vector<1x16x128xf32> to vector<1xf32>
      %37 = vector.shape_cast %36 : vector<1xf32> to vector<1x1x1xf32>
      %38 = vector.extract %37[0, 0, 0] : f32 from vector<1x1x1xf32>
      %39 = vector.broadcast %38 : f32 to vector<8x128xf32>
      %c0_22 = arith.constant 0 : index
      %c0_23 = arith.constant 0 : index
      %40 = vector.load %arg6[%c0_22, %c0_23] : memref<8x128xf32, #tpu.memory_space<vmem>>, vector<8x128xf32>
      tpu.vector_store %arg6[%c0_22, %c0_23], %39 {strides = array<i32>} : memref<8x128xf32, #tpu.memory_space<vmem>>, vector<8x128xf32>,
    } else {
    }
    return
  }
  func.func @transform_0(%arg0: i32, %arg1: i32) -> (i32, i32) {
    %c1_i32 = arith.constant 1 : i32
    %0 = arith.muli %arg0, %c1_i32 : i32
    %1 = arith.addi %0, %arg1 : i32
    %c0_i32 = arith.constant 0 : i32
    %2 = arith.minsi %1, %c0_i32 : i32
    %c0_i32_0 = arith.constant 0 : i32
    %c0_i32_1 = arith.constant 0 : i32
    return %2, %c0_i32_0 : i32, i32
  }
  func.func @transform_1(%arg0: i32, %arg1: i32) -> (i32, i32) {
    %c1_i32 = arith.constant 1 : i32
    %0 = arith.muli %arg0, %c1_i32 : i32
    %1 = arith.addi %0, %arg1 : i32
    %c0_i32 = arith.constant 0 : i32
    %2 = arith.minsi %1, %c0_i32 : i32
    %c0_i32_0 = arith.constant 0 : i32
    %c0_i32_1 = arith.constant 0 : i32
    return %2, %c0_i32_0 : i32, i32
  }
  func.func @transform_2(%arg0: i32, %arg1: i32) -> (i32, i32) {
    %c1_i32 = arith.constant 1 : i32
    %0 = arith.muli %arg0, %c1_i32 : i32
    %1 = arith.addi %0, %arg1 : i32
    %c0_i32 = arith.constant 0 : i32
    %2 = arith.minsi %1, %c0_i32 : i32
    %c0_i32_0 = arith.constant 0 : i32
    %c0_i32_1 = arith.constant 0 : i32
    return %2, %c0_i32_0 : i32, i32
  }
  func.func @transform_3(%arg0: i32, %arg1: i32) -> (i32, i32) {
    %c1_i32 = arith.constant 1 : i32
    %0 = arith.muli %arg0, %c1_i32 : i32
    %1 = arith.addi %0, %arg1 : i32
    %c0_i32 = arith.constant 0 : i32
    %2 = arith.minsi %1, %c0_i32 : i32
    %c0_i32_0 = arith.constant 0 : i32
    %c0_i32_1 = arith.constant 0 : i32
    return %2, %c0_i32_0 : i32, i32
  }
  func.func @transform_4(%arg0: i32, %arg1: i32) -> (i32, i32) {
    %c0_i32 = arith.constant 0 : i32
    %c0_i32_0 = arith.constant 0 : i32
    return %arg0, %c0_i32 : i32, i32
  }
}

module attributes {stable_mosaic.version = 11 : i64} {
  func.func @_hinge_kernel(%arg0: i32, %arg1: memref<3xf32, #tpu.memory_space<smem>>, %arg2: memref<16x128xf32, #tpu.memory_space<vmem>>, %arg3: memref<16x128xf32, #tpu.memory_space<vmem>>, %arg4: memref<16x128xf32, #tpu.memory_space<vmem>>) attributes {dimension_semantics = [#tpu.dimension_semantics<parallel>], iteration_bounds = array<i64: 1>, scalar_prefetch = 0 : i64, scratch_operands = 0 : i64, tpu.core_type = #tpu.core_type<tc>, window_params = [{transform_indices = @transform_0, window_bounds = array<i64: 3>}, {transform_indices = @transform_1, window_bounds = array<i64: 16, 128>}, {transform_indices = @transform_2, window_bounds = array<i64: 16, 128>}, {transform_indices = @transform_3, window_bounds = array<i64: 16, 128>}]} {
    %c0 = arith.constant 0 : index
    %0 = memref.load %arg1[%c0] : memref<3xf32, #tpu.memory_space<smem>>
    %c1 = arith.constant 1 : index
    %1 = memref.load %arg1[%c1] : memref<3xf32, #tpu.memory_space<smem>>
    %c2 = arith.constant 2 : index
    %2 = memref.load %arg1[%c2] : memref<3xf32, #tpu.memory_space<smem>>
    %c0_0 = arith.constant 0 : index
    %c0_1 = arith.constant 0 : index
    %3 = vector.load %arg3[%c0_0, %c0_1] : memref<16x128xf32, #tpu.memory_space<vmem>>, vector<16x128xf32>
    %c0_2 = arith.constant 0 : index
    %c0_3 = arith.constant 0 : index
    %4 = vector.load %arg2[%c0_2, %c0_3] : memref<16x128xf32, #tpu.memory_space<vmem>>, vector<16x128xf32>
    %5 = arith.subf %3, %4 : vector<16x128xf32>
    %6 = vector.broadcast %2 : f32 to vector<16x128xf32>
    %7 = arith.addf %5, %6 : vector<16x128xf32>
    %cst = arith.constant 0.000000e+00 : f32
    %8 = vector.broadcast %cst : f32 to vector<16x128xf32>
    %9 = arith.maximumf %7, %8 : vector<16x128xf32>
    %10 = vector.broadcast %1 : f32 to vector<16x128xf32>
    %11 = arith.mulf %10, %9 : vector<16x128xf32>
    %12 = vector.broadcast %0 : f32 to vector<16x128xf32>
    %13 = arith.addf %12, %11 : vector<16x128xf32>
    %c0_4 = arith.constant 0 : index
    %c0_5 = arith.constant 0 : index
    %14 = vector.load %arg4[%c0_4, %c0_5] : memref<16x128xf32, #tpu.memory_space<vmem>>, vector<16x128xf32>
    tpu.vector_store %arg4[%c0_4, %c0_5], %13 {strides = array<i32>} : memref<16x128xf32, #tpu.memory_space<vmem>>, vector<16x128xf32>,
    return
  }
  func.func @transform_0(%arg0: i32) -> i32 {
    %c0_i32 = arith.constant 0 : i32
    %c0_i32_0 = arith.constant 0 : i32
    return %c0_i32 : i32
  }
  func.func @transform_1(%arg0: i32) -> (i32, i32) {
    %c0_i32 = arith.constant 0 : i32
    %c0_i32_0 = arith.constant 0 : i32
    return %arg0, %c0_i32 : i32, i32
  }
  func.func @transform_2(%arg0: i32) -> (i32, i32) {
    %c0_i32 = arith.constant 0 : i32
    %c0_i32_0 = arith.constant 0 : i32
    return %arg0, %c0_i32 : i32, i32
  }
  func.func @transform_3(%arg0: i32) -> (i32, i32) {
    %c0_i32 = arith.constant 0 : i32
    %c0_i32_0 = arith.constant 0 : i32
    return %arg0, %c0_i32 : i32, i32
  }
}

</mosaic_0001>

<llo_original>
// kernel: joint_loss2.2
$region0: #{joint_loss2.2}
  #allocation0 [shape = 'u32[]', space=smem, size = 0x4, offset = 0x4, fixed_abs, tag = 'smem constant byte address 0x4 - core index']
  #allocation1 [shape = 'u32[72,128]{1,0:T(1,128)}', space=vmem, size = 0x9000, scoped, tag = 'internal scratch']
  #allocation2 [shape = 'f32[16,128]{1,0:T(8,128)}', space=vmem, size = 0x2000, scoped, tag = 'scratch operand']
  %s0 = inlined_call_operand.vmem [shape: f32[16,128], index: 0, kind: input, shape index: {}]
  %s1 = inlined_call_operand.vmem [shape: f32[16,128], index: 1, kind: input, shape index: {}]
  %s2 = inlined_call_operand.vmem [shape: f32[16,128], index: 2, kind: input, shape index: {}]
  %s3 = inlined_call_operand.vmem [shape: f32[16,128], index: 3, kind: input, shape index: {}]
  %s4 = inlined_call_operand.vmem [shape: f32[8,128], index: 4, kind: output, shape index: {}]
  %s5 = sld [smem:[#allocation0]]
  $region34: #{joint_loss2.2} parent=0
    _
  %s7 = ssub.s32 1, %s5
  %s8 = scalar_select 0, %s7, %s5
  // Predicated region
  $region2: #{joint_loss2.2} parent=0 // pred_check
    _
  $region3: #{joint_loss2.2} parent=0 // pred_check_branch
    %10 = sbr.rel (0) target = $region5
  $region4: #{joint_loss2.2} parent=0 // pred_region
    %s11 = sadd.s32 0, 0
    %p12 = scmp.lt.s32.totalorder %s11, 0
    %s13 = scalar_select %p12, %s11, 0
    %s14 = smul.u32 2, %s13
    %p15 = scmp.lt.s32.totalorder %s14, 1
    %s16 = scalar_select %p15, %s14, 1
    %s17 = smul.addr %s16, 8
    %s18 = scalar_lea.vmem %s0, %s17
    %s19 = sadd.s32 0, 0
    %p20 = scmp.lt.s32.totalorder %s19, 0
    %s21 = scalar_select %p20, %s19, 0
    %s22 = smul.u32 2, %s21
  $region5: #{joint_loss2.2} parent=0 // pred_fallthru
    _
  // Predicated region
  $region6: #{joint_loss2.2} parent=0 // pred_check
    _
  $region7: #{joint_loss2.2} parent=0 // pred_check_branch
    %24 = sbr.rel (0) target = $region9
  $region8: #{joint_loss2.2} parent=0 // pred_region
    %s25 = sadd.s32 0, 0
    %p26 = scmp.lt.s32.totalorder %s25, 0
    %s27 = scalar_select %p26, %s25, 0
    %s28 = smul.u32 2, %s27
    %p29 = scmp.lt.s32.totalorder %s28, 1
    %s30 = scalar_select %p29, %s28, 1
    %s31 = smul.addr %s30, 8
    %s32 = scalar_lea.vmem %s1, %s31
    %s33 = sadd.s32 0, 0
    %p34 = scmp.lt.s32.totalorder %s33, 0
    %s35 = scalar_select %p34, %s33, 0
    %s36 = smul.u32 2, %s35
  $region9: #{joint_loss2.2} parent=0 // pred_fallthru
    _
  // Predicated region
  $region10: #{joint_loss2.2} parent=0 // pred_check
    _
  $region11: #{joint_loss2.2} parent=0 // pred_check_branch
    %38 = sbr.rel (0) target = $region13
  $region12: #{joint_loss2.2} parent=0 // pred_region
    %s39 = sadd.s32 0, 0
    %p40 = scmp.lt.s32.totalorder %s39, 0
    %s41 = scalar_select %p40, %s39, 0
    %s42 = smul.u32 2, %s41
    %p43 = scmp.lt.s32.totalorder %s42, 1
    %s44 = scalar_select %p43, %s42, 1
    %s45 = smul.addr %s44, 8
    %s46 = scalar_lea.vmem %s2, %s45
    %s47 = sadd.s32 0, 0
    %p48 = scmp.lt.s32.totalorder %s47, 0
    %s49 = scalar_select %p48, %s47, 0
    %s50 = smul.u32 2, %s49
  $region13: #{joint_loss2.2} parent=0 // pred_fallthru
    _
  // Predicated region
  $region14: #{joint_loss2.2} parent=0 // pred_check
    _
  $region15: #{joint_loss2.2} parent=0 // pred_check_branch
    %52 = sbr.rel (0) target = $region17
  $region16: #{joint_loss2.2} parent=0 // pred_region
    %s53 = sadd.s32 0, 0
    %p54 = scmp.lt.s32.totalorder %s53, 0
    %s55 = scalar_select %p54, %s53, 0
    %s56 = smul.u32 2, %s55
    %p57 = scmp.lt.s32.totalorder %s56, 1
    %s58 = scalar_select %p57, %s56, 1
    %s59 = smul.addr %s58, 8
    %s60 = scalar_lea.vmem %s3, %s59
    %s61 = sadd.s32 0, 0
    %p62 = scmp.lt.s32.totalorder %s61, 0
    %s63 = scalar_select %p62, %s61, 0
    %s64 = smul.u32 2, %s63
  $region17: #{joint_loss2.2} parent=0 // pred_fallthru
    _
  %s65 = sadd.s32 0, 0
  %p66 = scmp.lt.s32.totalorder %s65, 0
  %s67 = scalar_select %p66, %s65, 0
  %s68 = smul.u32 2, %s67
  %p69 = scmp.lt.s32.totalorder %s68, 1
  %s70 = scalar_select %p69, %s68, 1
  %s71 = smul.addr %s70, 8
  %s72 = scalar_lea.vmem %s0, %s71
  %s73 = sadd.s32 0, 0
  %p74 = scmp.lt.s32.totalorder %s73, 0
  %s75 = scalar_select %p74, %s73, 0
  %s76 = smul.u32 2, %s75
  %p77 = scmp.lt.s32.totalorder %s76, 1
  %s78 = scalar_select %p77, %s76, 1
  %s79 = smul.addr %s78, 8
  %s80 = scalar_lea.vmem %s1, %s79
  %s81 = sadd.s32 0, 0
  %p82 = scmp.lt.s32.totalorder %s81, 0
  %s83 = scalar_select %p82, %s81, 0
  %s84 = smul.u32 2, %s83
  %p85 = scmp.lt.s32.totalorder %s84, 1
  %s86 = scalar_select %p85, %s84, 1
  %s87 = smul.addr %s86, 8
  %s88 = scalar_lea.vmem %s2, %s87
  %s89 = sadd.s32 0, 0
  %p90 = scmp.lt.s32.totalorder %s89, 0
  %s91 = scalar_select %p90, %s89, 0
  %s92 = smul.u32 2, %s91
  %p93 = scmp.lt.s32.totalorder %s92, 1
  %s94 = scalar_select %p93, %s92, 1
  %s95 = smul.addr %s94, 8
  %s96 = scalar_lea.vmem %s3, %s95
  %s97 = sadd.s32 0, 0
  %p98 = scmp.lt.s32.totalorder %s97, 0
  %s99 = scalar_select %p98, %s97, 0
  %s100 = smul.u32 2, %s99
  %p101 = scmp.lt.s32.totalorder %s100, 1
  %s102 = scalar_select %p101, %s100, 1
  %s103 = smul.addr %s102, 8
  %s104 = scalar_lea.vmem %s0, %s103
  %s105 = sadd.s32 0, 0
  %p106 = scmp.lt.s32.totalorder %s105, 0
  %s107 = scalar_select %p106, %s105, 0
  %s108 = smul.u32 2, %s107
  %s109 = sadd.s32 0, 0
  %p110 = scmp.lt.s32.totalorder %s109, 0
  %s111 = scalar_select %p110, %s109, 0
  %s112 = smul.u32 2, %s111
  %p113 = scmp.lt.s32.totalorder %s112, 1
  %s114 = scalar_select %p113, %s112, 1
  %s115 = smul.addr %s114, 8
  %s116 = scalar_lea.vmem %s1, %s115
  %s117 = sadd.s32 0, 0
  %p118 = scmp.lt.s32.totalorder %s117, 0
  %s119 = scalar_select %p118, %s117, 0
  %s120 = smul.u32 2, %s119
  %s121 = sadd.s32 0, 0
  %p122 = scmp.lt.s32.totalorder %s121, 0
  %s123 = scalar_select %p122, %s121, 0
  %s124 = smul.u32 2, %s123
  %p125 = scmp.lt.s32.totalorder %s124, 1
  %s126 = scalar_select %p125, %s124, 1
  %s127 = smul.addr %s126, 8
  %s128 = scalar_lea.vmem %s2, %s127
  %s129 = sadd.s32 0, 0
  %p130 = scmp.lt.s32.totalorder %s129, 0
  %s131 = scalar_select %p130, %s129, 0
  %s132 = smul.u32 2, %s131
  %s133 = sadd.s32 0, 0
  %p134 = scmp.lt.s32.totalorder %s133, 0
  %s135 = scalar_select %p134, %s133, 0
  %s136 = smul.u32 2, %s135
  %p137 = scmp.lt.s32.totalorder %s136, 1
  %s138 = scalar_select %p137, %s136, 1
  %s139 = smul.addr %s138, 8
  %s140 = scalar_lea.vmem %s3, %s139
  %s141 = sadd.s32 0, 0
  %p142 = scmp.lt.s32.totalorder %s141, 0
  %s143 = scalar_select %p142, %s141, 0
  %s144 = smul.u32 2, %s143
  %p145 = scmp.eq.s32.totalorder 0, 0
  // Predicated region
  $region18: #{joint_loss2.2} parent=0 // pred_check
    %p146 = pneg %p145
  $region19: #{joint_loss2.2} parent=0 // pred_check_branch
    %148 = sbr.rel (%p146) target = $region21
  $region20: #{joint_loss2.2} parent=0 // pred_region
    %149 = vst [vmem:[#allocation2] sm:$0xff] 0.0
    %150 = vst [vmem:[#allocation2 + $0x8] sm:$0xff] 0.0
  $region21: #{joint_loss2.2} parent=0 // pred_fallthru
    _
  %v151 = vld [vmem:[%s128] sm:$0xff]
  %v152 = vld [vmem:[%s128 + $0x8] sm:$0xff]
  %v153 = vld [vmem:[%s104] sm:$0xff]
  %v154 = vld [vmem:[%s104 + $0x8] sm:$0xff]
  %v155 = vsub.f32 %v151, %v153
  %v156 = vsub.f32 %v152, %v154
  %v157 = vld [vmem:[%s140] sm:$0xff]
  %v158 = vld [vmem:[%s140 + $0x8] sm:$0xff]
  %v159 = vld [vmem:[%s116] sm:$0xff]
  %v160 = vld [vmem:[%s116 + $0x8] sm:$0xff]
  %v161 = vsub.f32 %v157, %v159
  %v162 = vsub.f32 %v158, %v160
  %v163 = vand.u32 2147483647, %v155
  %v164 = vand.u32 2147483647, %v156
  %v165 = vand.u32 2147483647, %v161
  %v166 = vand.u32 2147483647, %v162
  %vm167 = vcmp.lt.f32.partialorder %v163, 1.0
  %vm168 = vcmp.lt.f32.partialorder %v164, 1.0
  %v169 = vmul.f32 %v155, 0.5
  %v170 = vmul.f32 %v156, 0.5
  %v171 = vmul.f32 %v169, %v155
  %v172 = vmul.f32 %v170, %v156
  %v173 = vsub.f32 %v163, 0.5
  %v174 = vsub.f32 %v164, 0.5
  %v175 = vsel %vm167, %v171, %v173
  %v176 = vsel %vm168, %v172, %v174
  %vm177 = vcmp.lt.f32.partialorder %v165, 1.0
  %vm178 = vcmp.lt.f32.partialorder %v166, 1.0
  %v179 = vmul.f32 %v161, 0.5
  %v180 = vmul.f32 %v162, 0.5
  %v181 = vmul.f32 %v179, %v161
  %v182 = vmul.f32 %v180, %v162
  %v183 = vsub.f32 %v165, 0.5
  %v184 = vsub.f32 %v166, 0.5
  %v185 = vsel %vm177, %v181, %v183
  %v186 = vsel %vm178, %v182, %v184
  %v187 = vadd.f32 %v175, %v185
  %v188 = vadd.f32 %v176, %v186
  %v189 = vld [vmem:[#allocation2] sm:$0xff]
  %v190 = vld [vmem:[#allocation2 + $0x8] sm:$0xff]
  %v191 = vadd.f32 %v189, %v187
  %v192 = vadd.f32 %v190, %v188
  %193 = vst [vmem:[#allocation2] sm:$0xff] %v191
  %194 = vst [vmem:[#allocation2 + $0x8] sm:$0xff] %v192
  // Predicated region
  $region22: #{joint_loss2.2} parent=0 // pred_check
    %p195 = pneg %p145
  $region23: #{joint_loss2.2} parent=0 // pred_check_branch
    %197 = sbr.rel (%p195) target = $region25
  $region24: #{joint_loss2.2} parent=0 // pred_region
    %v198 = vld [vmem:[#allocation2] sm:$0xff]
    %v199 = vld [vmem:[#allocation2 + $0x8] sm:$0xff]
    %v200 = vadd.f32 %v198, %v199
    %201 = vadd.xlane.f32.xlu0 %v200
    %v202 = vpop.xlane.xlu0 %201
    %v203 = vrot.slane %v202, 4
    %v204 = vadd.f32 %v202, %v203
    %v205 = vrot.slane %v204, 2
    %v206 = vadd.f32 %v204, %v205
    %v207 = vrot.slane %v206, 1
    %v208 = vadd.f32 %v206, %v207
    %s209 = vtos %v208
    %v210 = vstv %s209
    %211 = vst [vmem:[%s4] sm:$0xff] %v210
  $region25: #{joint_loss2.2} parent=0 // pred_fallthru
    _
  // Predicated region
  $region26: #{joint_loss2.2} parent=0 // pred_check
    _
  $region27: #{joint_loss2.2} parent=0 // pred_check_branch
    %213 = sbr.rel (0) target = $region29
  $region28: #{joint_loss2.2} parent=0 // pred_region
    _
  $region29: #{joint_loss2.2} parent=0 // pred_fallthru
    _
  // Predicated region
  $region30: #{joint_loss2.2} parent=0 // pred_check
    _
  $region31: #{joint_loss2.2} parent=0 // pred_check_branch
    %215 = sbr.rel (0) target = $region33
  $region32: #{joint_loss2.2} parent=0 // pred_region
    _
  $region33: #{joint_loss2.2} parent=0 // pred_fallthru
    _

// kernel: joint_loss2.3
$region0: #{joint_loss2.3}
  #allocation0 [shape = 'u32[]', space=smem, size = 0x4, offset = 0x4, fixed_abs, tag = 'smem constant byte address 0x4 - core index']
  #allocation1 [shape = 'u32[72,128]{1,0:T(1,128)}', space=vmem, size = 0x9000, scoped, tag = 'internal scratch']
  %s0 = inlined_call_operand.vmem [shape: f32[3], index: 0, kind: input, shape index: {}]
  %s1 = inlined_call_operand.vmem [shape: f32[16,128], index: 1, kind: input, shape index: {}]
  %s2 = inlined_call_operand.vmem [shape: f32[16,128], index: 2, kind: input, shape index: {}]
  %s3 = inlined_call_operand.vmem [shape: f32[16,128], index: 3, kind: output, shape index: {}]
  %s4 = sld [smem:[#allocation0]]
  $region26: #{joint_loss2.3} parent=0
    _
  %s6 = ssub.s32 1, %s4
  %s7 = scalar_select 0, %s6, %s4
  $region1: #{joint_loss2.3} parent=0
    #allocation2 [shape = 'u8[512]{0}', space=smem, size = 0x200, scoped, tag = 'input window, operand 0, single buffered']
    #allocation3 [shape = 's32[1]{0}', space=sflag, size = 0x4, scoped, tag = 'scoped memory for joint_loss2.3']
    %8 = vsyncpa [#allocation3], 0
    // Predicated region
    $region2: #{joint_loss2.3} parent=1 // pred_check
      _
    $region3: #{joint_loss2.3} parent=1 // pred_check_branch
      %10 = sbr.rel (0) target = $region5
    $region4: #{joint_loss2.3} parent=1 // pred_region
      %12 = vsyncadd [#allocation3], 0
      %s14 = sshll.u32 %s0, 4
      %s15 = int_to_ptr.vmem [resolvable:$true] %s14
      %17 = dma.vmem_to_smem %s15, 16, [#allocation2], [#allocation3]
    $region5: #{joint_loss2.3} parent=1 // pred_fallthru
      _
    // Predicated region
    $region6: #{joint_loss2.3} parent=1 // pred_check
      _
    $region7: #{joint_loss2.3} parent=1 // pred_check_branch
      %19 = sbr.rel (0) target = $region9
    $region8: #{joint_loss2.3} parent=1 // pred_region
      _
    $region9: #{joint_loss2.3} parent=1 // pred_fallthru
      _
    // Predicated region
    $region10: #{joint_loss2.3} parent=1 // pred_check
      _
    $region11: #{joint_loss2.3} parent=1 // pred_check_branch
      %21 = sbr.rel (0) target = $region13
    $region12: #{joint_loss2.3} parent=1 // pred_region
      _
    $region13: #{joint_loss2.3} parent=1 // pred_fallthru
      _
    // Predicated region
    $region14: #{joint_loss2.3} parent=1 // pred_check
      _
    $region15: #{joint_loss2.3} parent=1 // pred_check_branch
      %23 = sbr.rel (0) target = $region17
    $region16: #{joint_loss2.3} parent=1 // pred_region
      %25 = dma.done [#allocation3], 16
    $region17: #{joint_loss2.3} parent=1 // pred_fallthru
      _
    %26 = sfence
    %s27 = sld [smem:[#allocation2]]
    %s28 = sld [smem:[#allocation2 + $0x1]]
    %s29 = sld [smem:[#allocation2 + $0x2]]
    %v30 = vld [vmem:[%s2] sm:$0xff]
    %v31 = vld [vmem:[%s2 + $0x8] sm:$0xff]
    %v32 = vld [vmem:[%s1] sm:$0xff]
    %v33 = vld [vmem:[%s1 + $0x8] sm:$0xff]
    %v34 = vsub.f32 %v30, %v32
    %v35 = vsub.f32 %v31, %v33
    %v36 = vstv %s29
    %v37 = vadd.f32 %v34, %v36
    %v38 = vadd.f32 %v35, %v36
    %v39 = vmax.f32 %v37, 0.0
    %v40 = vmax.f32 %v38, 0.0
    %v41 = vstv %s28
    %v42 = vmul.f32 %v41, %v39
    %v43 = vmul.f32 %v41, %v40
    %v44 = vstv %s27
    %v45 = vadd.f32 %v44, %v42
    %v46 = vadd.f32 %v44, %v43
    %47 = vst [vmem:[%s3] sm:$0xff] %v45
    %48 = vst [vmem:[%s3 + $0x8] sm:$0xff] %v46
    // Predicated region
    $region18: #{joint_loss2.3} parent=1 // pred_check
      _
    $region19: #{joint_loss2.3} parent=1 // pred_check_branch
      %50 = sbr.rel (0) target = $region21
    $region20: #{joint_loss2.3} parent=1 // pred_region
      _
    $region21: #{joint_loss2.3} parent=1 // pred_fallthru
      _
    // Predicated region
    $region22: #{joint_loss2.3} parent=1 // pred_check
      _
    $region23: #{joint_loss2.3} parent=1 // pred_check_branch
      %52 = sbr.rel (0) target = $region25
    $region24: #{joint_loss2.3} parent=1 // pred_region
      _
    $region25: #{joint_loss2.3} parent=1 // pred_fallthru
      _
    %53 = vsyncpa [#allocation3], 1

</llo_original>
